<compile_context>
chip_gen: v5e
topology: v5e:2x2
jax: 0.10.0
libtpu: 0.0.40
codegen_flags: <defaults>
</compile_context>

<pallas_src>
import jax
import jax.numpy as jnp
from jax.experimental import pallas as pl
from jax.experimental.pallas import tpu as pltpu


def _round_up(v, m):
    return -(-v // m) * m


def _make_kernel(a_top, c_top, top_is_min, a_bot, c_bot, bot_is_min, final_bias):
    """Build the elementwise kernel with the scalar params baked in as constants.

    top branch:  relu(x*w1_00 + b1_0) * w2_00  ==  clamp_top(x*a_top + c_top, 0)
    bot branch:  relu(x*w1_10 + b1_1) * w2_01  ==  clamp_bot(x*a_bot + c_bot, 0)
    output    :  relu(top + bot + final_bias)
    where clamp is min(.,0) if the folded w2 scale is negative, else max(.,0).
    """
    clamp_top = jnp.minimum if top_is_min else jnp.maximum
    clamp_bot = jnp.minimum if bot_is_min else jnp.maximum

    def kernel(x_ref, o_ref):
        x = x_ref[...].astype(jnp.float32)          # upcast in-register only
        top = clamp_top(x * a_top + c_top, 0.0)
        bot = clamp_bot(x * a_bot + c_bot, 0.0)
        y = top + bot
        if final_bias != 0.0:                        # static Python check
            y = y + final_bias
        o_ref[...] = jnp.maximum(y, 0.0).astype(o_ref.dtype)

    return kernel


def _run_2d(x2d, kernel, out_dtype, max_tile_rows=512):
    """Run the elementwise kernel over a 2-D slab (rows, cols)."""
    rows, cols = x2d.shape
    if rows <= 8 or cols % 128 != 0:
        # Single full-extent block: legal even when dims aren't (8,128)-aligned.
        tile_rows = rows
    else:
        # >=2 grid steps whenever possible (feeds both v7x TensorCores),
        # sublane-aligned (multiple of 8), capped at 512 rows so the
        # double-buffered in+out footprint (~8 MiB f32) fits every generation.
        tile_rows = min(max_tile_rows, _round_up(pl.cdiv(rows, 2), 8))
    grid = (pl.cdiv(rows, tile_rows),)               # partial edge block is masked

    return pl.pallas_call(
        kernel,
        out_shape=jax.ShapeDtypeStruct((rows, cols), out_dtype),
        grid_spec=pltpu.PrefetchScalarGridSpec(
            num_scalar_prefetch=0,
            grid=grid,
            in_specs=[pl.BlockSpec((tile_rows, cols), lambda i: (i, 0))],
            out_specs=pl.BlockSpec((tile_rows, cols), lambda i: (i, 0)),
        ),
        compiler_params=pltpu.CompilerParams(
            dimension_semantics=("parallel",),        # shards across v7x's 2 TCs
            vmem_limit_bytes=32 * 1024 * 1024,        # > v5e 16 MiB default, < v7x 64 MiB
        ),
    )(x2d)


def basic_nn_forward(x, params, *, lanes=1024, max_tile_rows=512):
    """Apply BasicNN_train's forward elementwise to an arbitrarily-shaped array."""
    w1_00, w1_10, b1_0, b1_1, w2_00, w2_01, final_bias = (float(p) for p in params)
    kernel = _make_kernel(
        w1_00 * w2_00, b1_0 * w2_00, w2_00 < 0.0,     # folded top branch
        w1_10 * w2_01, b1_1 * w2_01, w2_01 < 0.0,     # folded bottom branch
        final_bias,
    )

    orig_shape = x.shape
    if jnp.issubdtype(x.dtype, jnp.floating):
        out_dtype = x.dtype                            # stream native dtype
    else:
        x = x.astype(jnp.float32)                      # torch int*float -> f32
        out_dtype = jnp.float32

    flat = x.reshape(-1)                               # metadata-only
    n = flat.shape[0]
    if n == 0:
        return jnp.zeros(orig_shape, out_dtype)

    n_main = (n // lanes) * lanes
    tail = n - n_main

    pieces = []
    if n_main:
        main = flat if tail == 0 else flat[:n_main]    # slice only when ragged
        out_main = _run_2d(main.reshape(n_main // lanes, lanes), kernel,
                           out_dtype, max_tile_rows)
        pieces.append(out_main.reshape(n_main))
    if tail:
        # Tiny (<1024-elem) full-extent block; no padding of the big slab.
        out_tail = _run_2d(flat[n_main:].reshape(1, tail), kernel,
                           out_dtype, max_tile_rows)
        pieces.append(out_tail.reshape(tail))

    out_flat = pieces[0] if len(pieces) == 1 else jnp.concatenate(pieces)
    return out_flat.reshape(orig_shape)


def make_params():
    # Deterministic parameters straight from the module's __init__:
    # (w1_00, w1_10, b1_0, b1_1, w2_00, w2_01, final_bias)
    return (1.7, 12.6, -0.85, 0.0, -40.8, 2.7, 0.0)


def reference_forward(x, params):
    # Pure-JAX reference mirroring the PyTorch forward exactly.
    w1_00, w1_10, b1_0, b1_1, w2_00, w2_01, final_bias = params
    top = jnp.maximum(x * w1_00 + b1_0, 0.0) * w2_00
    bot = jnp.maximum(x * w1_10 + b1_1, 0.0) * w2_01
    return jnp.maximum(top + bot + final_bias, 0.0)


if __name__ == "__main__":
    params = make_params()
    key = jax.random.PRNGKey(0)
    k0, k1, k2 = jax.random.split(key, 3)

    # (2,4,16,16): n=2048, divisible by 1024 -> zero-copy fast path, one block.
    x = jax.random.uniform(k0, (2, 4, 16, 16), dtype=jnp.float32)
    out = jax.block_until_ready(basic_nn_forward(x, params))
    assert out.shape == x.shape and out.dtype == x.dtype
    assert jnp.allclose(out, reference_forward(x, params), atol=1e-4, rtol=1e-4), \
        "mismatch vs reference (4-D fast path)"

    # (9,32,32): rows=9 -> 2-step grid with a masked partial edge block.
    x1 = jax.random.uniform(k1, (9, 32, 32), dtype=jnp.float32) * 2.0 - 0.5
    out1 = jax.block_until_ready(basic_nn_forward(x1, params))
    assert out1.shape == x1.shape
    assert jnp.allclose(out1, reference_forward(x1, params), atol=1e-4, rtol=1e-4), \
        "mismatch vs reference (partial edge block)"

    # (1000,): ragged (n % 1024 != 0) -> tiny full-extent tail block, no pad.
    x2 = jax.random.uniform(k2, (1000,), dtype=jnp.float32) * 2.0 - 0.5
    out2 = jax.block_until_ready(basic_nn_forward(x2, params))
    assert out2.shape == x2.shape
    assert jnp.allclose(out2, reference_forward(x2, params), atol=1e-4, rtol=1e-4), \
        "mismatch vs reference (ragged 1-D)"

    print("KERNEL_OK")
</pallas_src>

<mosaic_0001>
module attributes {stable_mosaic.version = 11 : i64} {
  func.func @kernel(%arg0: i32, %arg1: memref<2x1024xf32, #tpu.memory_space<vmem>>, %arg2: memref<2x1024xf32, #tpu.memory_space<vmem>>) attributes {dimension_semantics = [#tpu.dimension_semantics<parallel>], iteration_bounds = array<i64: 1>, scalar_prefetch = 0 : i64, scratch_operands = 0 : i64, tpu.core_type = #tpu.core_type<tc>, window_params = [{transform_indices = @transform_0, window_bounds = array<i64: 2, 1024>}, {transform_indices = @transform_1, window_bounds = array<i64: 2, 1024>}]} {
    %c0 = arith.constant 0 : index
    %c0_0 = arith.constant 0 : index
    %0 = vector.load %arg1[%c0, %c0_0] : memref<2x1024xf32, #tpu.memory_space<vmem>>, vector<2x1024xf32>
    %cst = arith.constant -6.936000e+01 : f32
    %1 = vector.broadcast %cst : f32 to vector<2x1024xf32>
    %2 = arith.mulf %0, %1 : vector<2x1024xf32>
    %cst_1 = arith.constant 3.468000e+01 : f32
    %3 = vector.broadcast %cst_1 : f32 to vector<2x1024xf32>
    %4 = arith.addf %2, %3 : vector<2x1024xf32>
    %cst_2 = arith.constant 0.000000e+00 : f32
    %5 = vector.broadcast %cst_2 : f32 to vector<2x1024xf32>
    %6 = arith.minimumf %4, %5 : vector<2x1024xf32>
    %cst_3 = arith.constant 3.402000e+01 : f32
    %7 = vector.broadcast %cst_3 : f32 to vector<2x1024xf32>
    %8 = arith.mulf %0, %7 : vector<2x1024xf32>
    %cst_4 = arith.constant 0.000000e+00 : f32
    %9 = vector.broadcast %cst_4 : f32 to vector<2x1024xf32>
    %10 = arith.addf %8, %9 : vector<2x1024xf32>
    %cst_5 = arith.constant 0.000000e+00 : f32
    %11 = vector.broadcast %cst_5 : f32 to vector<2x1024xf32>
    %12 = arith.maximumf %10, %11 : vector<2x1024xf32>
    %13 = arith.addf %6, %12 : vector<2x1024xf32>
    %cst_6 = arith.constant 0.000000e+00 : f32
    %14 = vector.broadcast %cst_6 : f32 to vector<2x1024xf32>
    %15 = arith.maximumf %13, %14 : vector<2x1024xf32>
    %c0_7 = arith.constant 0 : index
    %c0_8 = arith.constant 0 : index
    %16 = vector.load %arg2[%c0_7, %c0_8] : memref<2x1024xf32, #tpu.memory_space<vmem>>, vector<2x1024xf32>
    tpu.vector_store %arg2[%c0_7, %c0_8], %15 {strides = array<i32>} : memref<2x1024xf32, #tpu.memory_space<vmem>>, vector<2x1024xf32>,
    return
  }
  func.func @transform_0(%arg0: i32) -> (i32, i32) {
    %c0_i32 = arith.constant 0 : i32
    %c0_i32_0 = arith.constant 0 : i32
    return %arg0, %c0_i32 : i32, i32
  }
  func.func @transform_1(%arg0: i32) -> (i32, i32) {
    %c0_i32 = arith.constant 0 : i32
    %c0_i32_0 = arith.constant 0 : i32
    return %arg0, %c0_i32 : i32, i32
  }
}

</mosaic_0001>

<llo_original>
// kernel: tpu_custom_call.1
$region0: #{tpu_custom_call.1}
  #allocation0 [shape = 'u32[]', space=smem, size = 0x4, offset = 0x4, fixed_abs, tag = 'smem constant byte address 0x4 - core index']
  #allocation1 [shape = 'u32[72,128]{1,0:T(1,128)}', space=vmem, size = 0x9000, scoped, tag = 'internal scratch']
  %s0 = inlined_call_operand.hbm [shape: f32[2,1024], index: 0, kind: input, shape index: {}]
  %s1 = inlined_call_operand.hbm [shape: f32[2,1024], index: 1, kind: output, shape index: {}]
  %s2 = sld [smem:[#allocation0]]
  $region18: #{tpu_custom_call.1} parent=0
    _
  %s4 = ssub.s32 1, %s2
  %s5 = scalar_select 0, %s4, %s2
  $region1: #{tpu_custom_call.1} parent=0
    #allocation2 [shape = 'u8[8192]{0}', space=vmem, size = 0x2000, scoped, tag = 'input window, operand 0, single buffered']
    #allocation3 [shape = 's32[1]{0}', space=sflag, size = 0x4, scoped, tag = 'scoped memory for tpu_custom_call.1']
    #allocation4 [shape = 's32[1]{0}', space=sflag, size = 0x4, scoped, tag = 'scoped memory for tpu_custom_call.1']
    #allocation5 [shape = 'u8[8192]{0}', space=vmem, size = 0x2000, scoped, tag = 'output window, operand 0, single buffered']
    %6 = vsyncpa [#allocation3], 0
    %7 = vsyncpa [#allocation4], 0
    // Predicated region
    $region2: #{tpu_custom_call.1} parent=1 // pred_check
      _
    $region3: #{tpu_custom_call.1} parent=1 // pred_check_branch
      %9 = sbr.rel (0) target = $region5
    $region4: #{tpu_custom_call.1} parent=1 // pred_region
      %11 = vsyncadd [#allocation3], 0
      %s13 = sshll.u32 %s0, 4
      %s14 = int_to_ptr.hbm [resolvable:$true] %s13
      %s15 = sshll.u32 [#allocation2], 4
      %s16 = int_to_ptr.vmem [resolvable:$true] %s15
      %18 = dma.hbm_to_vmem [thread:$0]  %s14, 256, %s16, [#allocation3]
    $region5: #{tpu_custom_call.1} parent=1 // pred_fallthru
      _
    // Predicated region
    $region6: #{tpu_custom_call.1} parent=1 // pred_check
      _
    $region7: #{tpu_custom_call.1} parent=1 // pred_check_branch
      %20 = sbr.rel (0) target = $region9
    $region8: #{tpu_custom_call.1} parent=1 // pred_region
      %22 = dma.done [#allocation3], 256
    $region9: #{tpu_custom_call.1} parent=1 // pred_fallthru
      _
    %v23 = vld [vmem:[#allocation2] sm:$0xff]
    %v24 = vld [vmem:[#allocation2 + $0x8] sm:$0xff]
    %v25 = vmul.f32 %v23, -69.36
    %v26 = vmul.f32 %v24, -69.36
    %v27 = vadd.f32 %v25, 34.68
    %v28 = vadd.f32 %v26, 34.68
    %v29 = vmin.f32 %v27, 0.0
    %v30 = vmin.f32 %v28, 0.0
    %v31 = vmul.f32 %v23, 34.02
    %v32 = vmul.f32 %v24, 34.02
    %v33 = vadd.f32 %v31, 0.0
    %v34 = vadd.f32 %v32, 0.0
    %v35 = vmax.f32 %v33, 0.0
    %v36 = vmax.f32 %v34, 0.0
    %v37 = vadd.f32 %v29, %v35
    %v38 = vadd.f32 %v30, %v36
    %v39 = vmax.f32 %v37, 0.0
    %v40 = vmax.f32 %v38, 0.0
    %41 = vst [vmem:[#allocation5] sm:$0xff] %v39
    %42 = vst [vmem:[#allocation5 + $0x8] sm:$0xff] %v40
    // Predicated region
    $region10: #{tpu_custom_call.1} parent=1 // pred_check
      _
    $region11: #{tpu_custom_call.1} parent=1 // pred_check_branch
      %44 = sbr.rel (0) target = $region13
    $region12: #{tpu_custom_call.1} parent=1 // pred_region
      %46 = vsyncadd [#allocation4], 0
      %s48 = sshll.u32 [#allocation5], 4
      %s49 = int_to_ptr.vmem [resolvable:$true] %s48
      %s50 = sshll.u32 %s1, 4
      %s51 = int_to_ptr.hbm [resolvable:$true] %s50
      %53 = dma.vmem_to_hbm [thread:$0]  %s49, 256, %s51, [#allocation4]
    $region13: #{tpu_custom_call.1} parent=1 // pred_fallthru
      _
    // Predicated region
    $region14: #{tpu_custom_call.1} parent=1 // pred_check
      _
    $region15: #{tpu_custom_call.1} parent=1 // pred_check_branch
      %55 = sbr.rel (0) target = $region17
    $region16: #{tpu_custom_call.1} parent=1 // pred_region
      %57 = dma.done [#allocation4], 256
    $region17: #{tpu_custom_call.1} parent=1 // pred_fallthru
      _
    %58 = vsyncpa [#allocation3], 1
    %59 = vsyncpa [#allocation4], 1

</llo_original>
